<compile_context>
chip_gen: v6e
topology: v6e:2x2x1
jax: 0.10.0
libtpu: 0.0.40
codegen_flags: <defaults>
</compile_context>

<pallas_src>
import functools
import math

import jax
import jax.numpy as jnp
from jax.experimental import pallas as pl
from jax.experimental.pallas import tpu as pltpu


def _ru(x, m):
    """Round x up to a multiple of m."""
    return ((x + m - 1) // m) * m


def _row_layout(k_sp, c_style):
    """Row offsets of the packed weight slab (sections start 8-row aligned)."""
    row_sp_b = _ru(k_sp, 8)              # spatial-conv bias row
    row_pool_w = _ru(row_sp_b + 1, 8)    # fused pooled (pointwise|bias) weight rows
    row_pool_b = row_pool_w + c_style    # fused pooled bias row
    total_rows = _ru(row_pool_b + 1, 8)
    return row_sp_b, row_pool_w, row_pool_b, total_rows


def pack_kernel_predictor_params(params, *, in_channels, out_channels, n_groups,
                                 style_channels, kernel_size):
    """One-time packing of all conv weights/biases into a single lane-dense slab.

    Layout (rows):
      [0 : k_sp)                       spatial conv weight, [Cstyle*k*k, c_sp]
      [row_sp_b]                       spatial conv bias
      [row_pool_w : row_pool_w+Cstyle) fused pooled weight, cols = [pointwise | bias]
      [row_pool_b]                     fused pooled bias,   cols = [pointwise | bias]
    All columns are zero-padded out to a multiple of 128 lanes.
    """
    k = kernel_size
    k_sp = style_channels * k * k
    c_sp = in_channels * out_channels // n_groups
    c_pw = out_channels * out_channels // n_groups
    c_b = out_channels
    n_lanes = _ru(max(c_sp, c_pw + c_b), 128)
    row_sp_b, row_pool_w, row_pool_b, total_rows = _row_layout(k_sp, style_channels)

    wsp_t = params["spatial_w"].reshape(c_sp, k_sp).T.astype(jnp.float32)       # [k_sp, c_sp]
    wpool_t = jnp.concatenate(
        [params["pointwise_w"].reshape(c_pw, style_channels).T,
         params["bias_w"].reshape(c_b, style_channels).T],
        axis=1).astype(jnp.float32)                                             # [Cstyle, c_pw+c_b]
    bpool = jnp.concatenate(
        [params["pointwise_b"], params["bias_b"]]).astype(jnp.float32)          # [c_pw+c_b]

    slab = jnp.zeros((total_rows, n_lanes), jnp.float32)
    slab = slab.at[:k_sp, :c_sp].set(wsp_t)
    slab = slab.at[row_sp_b, :c_sp].set(params["spatial_b"].astype(jnp.float32))
    slab = slab.at[row_pool_w:row_pool_w + style_channels, :c_pw + c_b].set(wpool_t)
    slab = slab.at[row_pool_b, :c_pw + c_b].set(bpool)
    return slab


def _kernel_predictor_kernel(patches_ref, pooled_ref, wts_ref, out_ref, *,
                             k_sp, c_style, bhw, batch,
                             row_sp_b, row_pool_w, row_pool_b, row_out_pool):
    # --- spatial reflect-pad conv as im2col GEMM (bias folded into slab) ----
    sp = jnp.dot(patches_ref[...], wts_ref[0:k_sp, :],
                 preferred_element_type=jnp.float32)
    sp = sp + wts_ref[row_sp_b:row_sp_b + 1, :]          # broadcast bias row
    out_ref[0:bhw, :] = sp.astype(out_ref.dtype)

    # --- fused pointwise + bias 1x1 convs on pooled style vector (one GEMM) -
    pw = jnp.dot(pooled_ref[...], wts_ref[row_pool_w:row_pool_w + c_style, :],
                 preferred_element_type=jnp.float32)
    pw = pw + wts_ref[row_pool_b:row_pool_b + 1, :]      # broadcast bias row
    out_ref[row_out_pool:row_out_pool + batch, :] = pw.astype(out_ref.dtype)


def kernel_predictor_forward(w, packed_weights, *, in_channels, out_channels,
                             n_groups, kernel_size):
    B, c_style, H, W = w.shape
    k = kernel_size
    assert H == k and W == k, "AesFA KernelPredictor expects spatial dims == kernel_size"
    assert k % 2 == 1, "reflect-pad 'same' conv + final reshape requires odd kernel_size"
    pad = math.ceil((k - 1) / 2)
    assert pad < H, "PyTorch 'reflect' padding requires pad < spatial size"

    c_sp = in_channels * out_channels // n_groups
    c_pw = out_channels * out_channels // n_groups
    c_b = out_channels
    k_sp = c_style * k * k
    n_lanes = _ru(max(c_sp, c_pw + c_b), 128)
    row_sp_b, row_pool_w, row_pool_b, total_w_rows = _row_layout(k_sp, c_style)
    assert packed_weights.shape == (total_w_rows, n_lanes)

    bhw = B * H * W
    row_out_pool = _ru(bhw, 8)                 # pooled results start 8-row aligned
    total_out_rows = _ru(row_out_pool + B, 8)

    # ---- glue: reflect-pad im2col as a single gather (indexing only) -------
    hh = jnp.arange(H)[:, None] + jnp.arange(k)[None, :] - pad        # [H, k]
    hh = jnp.abs(hh)
    hh = jnp.where(hh >= H, 2 * (H - 1) - hh, hh)
    ww = jnp.arange(W)[:, None] + jnp.arange(k)[None, :] - pad        # [W, k]
    ww = jnp.abs(ww)
    ww = jnp.where(ww >= W, 2 * (W - 1) - ww, ww)
    pat = w[:, :, hh[:, None, :, None], ww[None, :, None, :]]         # [B, C, H, W, k, k]
    patches = jnp.transpose(pat, (0, 2, 3, 1, 4, 5)).reshape(bhw, k_sp)

    # ---- glue: AdaptiveAvgPool2d((1,1)) -> [B, Cstyle] ----------------------
    pooled = jnp.mean(w, axis=(2, 3))

    kernel = functools.partial(
        _kernel_predictor_kernel,
        k_sp=k_sp, c_style=c_style, bhw=bhw, batch=B,
        row_sp_b=row_sp_b, row_pool_w=row_pool_w, row_pool_b=row_pool_b,
        row_out_pool=row_out_pool)

    out_slab = pl.pallas_call(
        kernel,
        out_shape=jax.ShapeDtypeStruct((total_out_rows, n_lanes), jnp.float32),
        in_specs=[pl.BlockSpec(memory_space=pltpu.MemorySpace.VMEM)] * 3,
        out_specs=pl.BlockSpec(memory_space=pltpu.MemorySpace.VMEM),
    )(patches.astype(jnp.float32), pooled.astype(jnp.float32), packed_weights)

    # ---- glue: unpack slab to the module's output conventions ---------------
    sp_flat = out_slab[:bhw, :c_sp]                                   # rows = (b, h, w)
    w_spatial = sp_flat.reshape(B, H, W, c_sp).transpose(0, 3, 1, 2)  # NCHW conv out
    w_spatial = w_spatial.reshape(B, out_channels, in_channels // n_groups, k, k)
    pw_rows = out_slab[row_out_pool:row_out_pool + B, :]
    w_pointwise = pw_rows[:, :c_pw].reshape(B, out_channels, out_channels // n_groups, 1, 1)
    bias = pw_rows[:, c_pw:c_pw + c_b].reshape(B, out_channels)
    return w_spatial, w_pointwise, bias


def _reference_forward(w, params, *, in_channels, out_channels, n_groups, kernel_size):
    """Pure-JAX reference (lax conv + mean pooling) for correctness check."""
    B, c_style, H, W = w.shape
    k = kernel_size
    pad = math.ceil((k - 1) / 2)
    c_pw = out_channels * out_channels // n_groups
    c_b = out_channels

    wp = jnp.pad(w, ((0, 0), (0, 0), (pad, pad), (pad, pad)), mode="reflect")
    sp = jax.lax.conv_general_dilated(
        wp, params["spatial_w"], window_strides=(1, 1), padding="VALID",
        dimension_numbers=("NCHW", "OIHW", "NCHW"))
    sp = sp + params["spatial_b"][None, :, None, None]
    w_spatial = sp.reshape(B, out_channels, in_channels // n_groups, k, k)

    pooled = jnp.mean(w, axis=(2, 3))                                   # [B, Cstyle]
    pw = pooled @ params["pointwise_w"].reshape(c_pw, c_style).T + params["pointwise_b"]
    w_pointwise = pw.reshape(B, out_channels, out_channels // n_groups, 1, 1)
    bb = pooled @ params["bias_w"].reshape(c_b, c_style).T + params["bias_b"]
    bias = bb.reshape(B, out_channels)
    return w_spatial, w_pointwise, bias


if __name__ == "__main__":
    # Small shapes consistent with the module.
    B = 2
    in_channels = 16
    out_channels = 16
    n_groups = 4
    style_channels = 32
    kernel_size = 3

    c_sp = in_channels * out_channels // n_groups
    c_pw = out_channels * out_channels // n_groups
    c_b = out_channels

    key = jax.random.PRNGKey(0)
    ks = jax.random.split(key, 7)
    params = {
        "spatial_w": jax.random.normal(ks[0], (c_sp, style_channels, kernel_size, kernel_size), jnp.float32) * 0.05,
        "spatial_b": jax.random.normal(ks[1], (c_sp,), jnp.float32) * 0.05,
        "pointwise_w": jax.random.normal(ks[2], (c_pw, style_channels, 1, 1), jnp.float32) * 0.05,
        "pointwise_b": jax.random.normal(ks[3], (c_pw,), jnp.float32) * 0.05,
        "bias_w": jax.random.normal(ks[4], (c_b, style_channels, 1, 1), jnp.float32) * 0.05,
        "bias_b": jax.random.normal(ks[5], (c_b,), jnp.float32) * 0.05,
    }
    # style feature map: spatial size == kernel_size (as the module's reshape requires)
    w = jax.random.normal(ks[6], (B, style_channels, kernel_size, kernel_size), jnp.float32)

    # One-time weight packing, hoisted out of the per-forward path.
    packed = jax.block_until_ready(pack_kernel_predictor_params(
        params, in_channels=in_channels, out_channels=out_channels,
        n_groups=n_groups, style_channels=style_channels, kernel_size=kernel_size))

    fwd = jax.jit(functools.partial(
        kernel_predictor_forward, in_channels=in_channels, out_channels=out_channels,
        n_groups=n_groups, kernel_size=kernel_size))

    w_spatial, w_pointwise, bias = fwd(w, packed)
    jax.block_until_ready((w_spatial, w_pointwise, bias))

    ref_sp, ref_pw, ref_b = _reference_forward(
        w, params, in_channels=in_channels, out_channels=out_channels,
        n_groups=n_groups, kernel_size=kernel_size)

    assert w_spatial.shape == (B, out_channels, in_channels // n_groups, kernel_size, kernel_size)
    assert w_pointwise.shape == (B, out_channels, out_channels // n_groups, 1, 1)
    assert bias.shape == (B, out_channels)
    assert jnp.allclose(w_spatial, ref_sp, atol=1e-4, rtol=1e-4)
    assert jnp.allclose(w_pointwise, ref_pw, atol=1e-4, rtol=1e-4)
    assert jnp.allclose(bias, ref_b, atol=1e-4, rtol=1e-4)

    print("KERNEL_OK")
</pallas_src>

<mosaic_0001>
module attributes {stable_mosaic.version = 11 : i64} {
  func.func @_kernel_predictor_kernel(%arg0: memref<18x288xf32, #tpu.memory_space<vmem>>, %arg1: memref<2x32xf32, #tpu.memory_space<vmem>>, %arg2: memref<336x128xf32, #tpu.memory_space<vmem>>, %arg3: memref<32x128xf32, #tpu.memory_space<vmem>>) attributes {dimension_semantics = [], scalar_prefetch = 0 : i64, scratch_operands = 0 : i64, tpu.core_type = #tpu.core_type<tc>} {
    %c0 = arith.constant 0 : index
    %c0_0 = arith.constant 0 : index
    %0 = vector.load %arg0[%c0, %c0_0] : memref<18x288xf32, #tpu.memory_space<vmem>>, vector<18x288xf32>
    %c0_1 = arith.constant 0 : index
    %c0_2 = arith.constant 0 : index
    %1 = vector.load %arg2[%c0_1, %c0_2] : memref<336x128xf32, #tpu.memory_space<vmem>>, vector<288x128xf32>
    %cst = arith.constant dense<0.000000e+00> : vector<18x128xf32>
    %2 = tpu.matmul %0, %1, %cst {dimension_numbers = #tpu.dot_dimension_numbers<[1], [0], [0], [1], [0, 0, 1, 1], [], []>} : vector<18x288xf32>, vector<288x128xf32>, vector<18x128xf32> -> vector<18x128xf32>
    %c288 = arith.constant 288 : index
    %c0_3 = arith.constant 0 : index
    %3 = vector.load %arg2[%c288, %c0_3] : memref<336x128xf32, #tpu.memory_space<vmem>>, vector<1x128xf32>
    %4 = vector.broadcast %3 : vector<1x128xf32> to vector<18x128xf32>
    %5 = arith.addf %2, %4 : vector<18x128xf32>
    %c0_4 = arith.constant 0 : index
    %c0_5 = arith.constant 0 : index
    %6 = vector.load %arg3[%c0_4, %c0_5] : memref<32x128xf32, #tpu.memory_space<vmem>>, vector<18x128xf32>
    tpu.vector_store %arg3[%c0_4, %c0_5], %5 {strides = array<i32>} : memref<32x128xf32, #tpu.memory_space<vmem>>, vector<18x128xf32>,
    %c0_6 = arith.constant 0 : index
    %c0_7 = arith.constant 0 : index
    %7 = vector.load %arg1[%c0_6, %c0_7] : memref<2x32xf32, #tpu.memory_space<vmem>>, vector<2x32xf32>
    %c296 = arith.constant 296 : index
    %c0_8 = arith.constant 0 : index
    %8 = vector.load %arg2[%c296, %c0_8] : memref<336x128xf32, #tpu.memory_space<vmem>>, vector<32x128xf32>
    %cst_9 = arith.constant dense<0.000000e+00> : vector<2x128xf32>
    %9 = tpu.matmul %7, %8, %cst_9 {dimension_numbers = #tpu.dot_dimension_numbers<[1], [0], [0], [1], [0, 0, 1, 1], [], []>} : vector<2x32xf32>, vector<32x128xf32>, vector<2x128xf32> -> vector<2x128xf32>
    %c328 = arith.constant 328 : index
    %c0_10 = arith.constant 0 : index
    %10 = vector.load %arg2[%c328, %c0_10] : memref<336x128xf32, #tpu.memory_space<vmem>>, vector<1x128xf32>
    %11 = vector.broadcast %10 : vector<1x128xf32> to vector<2x128xf32>
    %12 = arith.addf %9, %11 : vector<2x128xf32>
    %c24 = arith.constant 24 : index
    %c0_11 = arith.constant 0 : index
    %13 = vector.load %arg3[%c24, %c0_11] : memref<32x128xf32, #tpu.memory_space<vmem>>, vector<2x128xf32>
    tpu.vector_store %arg3[%c24, %c0_11], %12 {strides = array<i32>} : memref<32x128xf32, #tpu.memory_space<vmem>>, vector<2x128xf32>,
    return
  }
}

</mosaic_0001>

<llo_original>
// kernel: kernel_predictor_forward.1
$region0: #{kernel_predictor_forward.1}
  #allocation0 [shape = 'u32[]', space=smem, size = 0x4, offset = 0x4, fixed_abs, tag = 'smem constant byte address 0x4 - core index']
  #allocation1 [shape = 'u32[144,128]{1,0:T(1,128)}', space=vmem, size = 0x12000, scoped, tag = 'internal scratch']
  %s0 = inlined_call_operand.vmem [shape: f32[18,288], index: 0, kind: input, shape index: {}]
  %s1 = inlined_call_operand.vmem [shape: f32[2,32], index: 1, kind: input, shape index: {}]
  %s2 = inlined_call_operand.vmem [shape: f32[336,128], index: 2, kind: input, shape index: {}]
  %s3 = inlined_call_operand.vmem [shape: f32[32,128], index: 3, kind: output, shape index: {}]
  %s4 = sld [smem:[#allocation0]]
  $region22: #{kernel_predictor_forward.1} parent=0
    _
  %s6 = ssub.s32 1, %s4
  %s7 = scalar_select 0, %s6, %s4
  // Predicated region
  $region2: #{kernel_predictor_forward.1} parent=0 // pred_check
    _
  $region3: #{kernel_predictor_forward.1} parent=0 // pred_check_branch
    %9 = sbr.rel (0) target = $region5
  $region4: #{kernel_predictor_forward.1} parent=0 // pred_region
    _
  $region5: #{kernel_predictor_forward.1} parent=0 // pred_fallthru
    _
  // Predicated region
  $region6: #{kernel_predictor_forward.1} parent=0 // pred_check
    _
  $region7: #{kernel_predictor_forward.1} parent=0 // pred_check_branch
    %11 = sbr.rel (0) target = $region9
  $region8: #{kernel_predictor_forward.1} parent=0 // pred_region
    _
  $region9: #{kernel_predictor_forward.1} parent=0 // pred_fallthru
    _
  // Predicated region
  $region10: #{kernel_predictor_forward.1} parent=0 // pred_check
    _
  $region11: #{kernel_predictor_forward.1} parent=0 // pred_check_branch
    %13 = sbr.rel (0) target = $region13
  $region12: #{kernel_predictor_forward.1} parent=0 // pred_region
    _
  $region13: #{kernel_predictor_forward.1} parent=0 // pred_fallthru
    _
  %v14 = vld [vmem:[%s0] sm:$0xff]
  %v15 = vld [vmem:[%s0 + $0x8] sm:$0xff]
  %v16 = vld [vmem:[%s0 + $0x10] sm:$0xff]
  %v17 = vld [vmem:[%s0 + $0x18] sm:$0xff]
  %v18 = vld [vmem:[%s0 + $0x20] sm:$0xff]
  %v19 = vld [vmem:[%s0 + $0x28] sm:$0xff]
  %v20 = vld [vmem:[%s0 + $0x30] sm:$0x3]
  %v21 = vld [vmem:[%s0 + $0x38] sm:$0x3]
  %v22 = vld [vmem:[%s0 + $0x40] sm:$0x3]
  %v23 = vld [vmem:[%s2] sm:$0xff]
  %v24 = vld [vmem:[%s2 + $0x8] sm:$0xff]
  %v25 = vld [vmem:[%s2 + $0x10] sm:$0xff]
  %v26 = vld [vmem:[%s2 + $0x18] sm:$0xff]
  %v27 = vld [vmem:[%s2 + $0x20] sm:$0xff]
  %v28 = vld [vmem:[%s2 + $0x28] sm:$0xff]
  %v29 = vld [vmem:[%s2 + $0x30] sm:$0xff]
  %v30 = vld [vmem:[%s2 + $0x38] sm:$0xff]
  %v31 = vld [vmem:[%s2 + $0x40] sm:$0xff]
  %v32 = vld [vmem:[%s2 + $0x48] sm:$0xff]
  %v33 = vld [vmem:[%s2 + $0x50] sm:$0xff]
  %v34 = vld [vmem:[%s2 + $0x58] sm:$0xff]
  %v35 = vld [vmem:[%s2 + $0x60] sm:$0xff]
  %v36 = vld [vmem:[%s2 + $0x68] sm:$0xff]
  %v37 = vld [vmem:[%s2 + $0x70] sm:$0xff]
  %v38 = vld [vmem:[%s2 + $0x78] sm:$0xff]
  %v39 = vld [vmem:[%s2 + $0x80] sm:$0xff]
  %v40 = vld [vmem:[%s2 + $0x88] sm:$0xff]
  %v41 = vld [vmem:[%s2 + $0x90] sm:$0xff]
  %v42 = vld [vmem:[%s2 + $0x98] sm:$0xff]
  %v43 = vld [vmem:[%s2 + $0xa0] sm:$0xff]
  %v44 = vld [vmem:[%s2 + $0xa8] sm:$0xff]
  %v45 = vld [vmem:[%s2 + $0xb0] sm:$0xff]
  %v46 = vld [vmem:[%s2 + $0xb8] sm:$0xff]
  %v47 = vld [vmem:[%s2 + $0xc0] sm:$0xff]
  %v48 = vld [vmem:[%s2 + $0xc8] sm:$0xff]
  %v49 = vld [vmem:[%s2 + $0xd0] sm:$0xff]
  %v50 = vld [vmem:[%s2 + $0xd8] sm:$0xff]
  %v51 = vld [vmem:[%s2 + $0xe0] sm:$0xff]
  %v52 = vld [vmem:[%s2 + $0xe8] sm:$0xff]
  %v53 = vld [vmem:[%s2 + $0xf0] sm:$0xff]
  %v54 = vld [vmem:[%s2 + $0xf8] sm:$0xff]
  %v55 = vld [vmem:[%s2 + $0x100] sm:$0xff]
  %v56 = vld [vmem:[%s2 + $0x108] sm:$0xff]
  %v57 = vld [vmem:[%s2 + $0x110] sm:$0xff]
  %v58 = vld [vmem:[%s2 + $0x118] sm:$0xff]
  %v59 = vld [vmem:[%s2 + $0x120] sm:$0x1]
  %v60 = vlaneseq
  %v61 = vshrl.u32 %v60, 7
  %v62 = vsub.s32 0, %v61
  %v63 = vrot.slane %v59, %v62
  %vm64 = vcmask 261120
  %v66 = vsel %vm64, %v16, 0
  %v69 = vsel %vm64, %v19, 0
  %v72 = vsel %vm64, %v22, 0
  %74 = vmatprep.subr.mxu0 0.0
  %75 = vmatpush1.msra.mxu0 %v38
  %76 = vmatprep.subr.mxu0 0.0
  %77 = vmatpush1.msra.mxu0 %v37
  %78 = vmatprep.subr.mxu0 0.0
  %79 = vmatpush1.msra.mxu0 %v36
  %80 = vmatprep.subr.mxu0 0.0
  %81 = vmatpush1.msra.mxu0 %v35
  %82 = vmatprep.subr.mxu0 0.0
  %83 = vmatpush1.msra.mxu0 %v34
  %84 = vmatprep.subr.mxu0 0.0
  %85 = vmatpush1.msra.mxu0 %v33
  %86 = vmatprep.subr.mxu0 0.0
  %87 = vmatpush1.msra.mxu0 %v32
  %88 = vmatprep.subr.mxu0 0.0
  %89 = vmatpush1.msra.mxu0 %v31
  %90 = vmatprep.subr.mxu0 0.0
  %91 = vmatpush1.msra.mxu0 %v30
  %92 = vmatprep.subr.mxu0 0.0
  %93 = vmatpush1.msra.mxu0 %v29
  %94 = vmatprep.subr.mxu0 0.0
  %95 = vmatpush1.msra.mxu0 %v28
  %96 = vmatprep.subr.mxu0 0.0
  %97 = vmatpush1.msra.mxu0 %v27
  %98 = vmatprep.subr.mxu0 0.0
  %99 = vmatpush1.msra.mxu0 %v26
  %100 = vmatprep.subr.mxu0 0.0
  %101 = vmatpush1.msra.mxu0 %v25
  %102 = vmatprep.subr.mxu0 0.0
  %103 = vmatpush1.msra.mxu0 %v24
  %104 = vmatprep.subr.mxu0 0.0
  %105 = vmatpush1.msra.mxu0 %v23
  %106 = vmatprep.subr.mxu0 0.0
  %107 = vmatpush2.msra.mxu0 %v54
  %108 = vmatprep.subr.mxu0 0.0
  %109 = vmatpush2.msra.mxu0 %v53
  %110 = vmatprep.subr.mxu0 0.0
  %111 = vmatpush2.msra.mxu0 %v52
  %112 = vmatprep.subr.mxu0 0.0
  %113 = vmatpush2.msra.mxu0 %v51
  %114 = vmatprep.subr.mxu0 0.0
  %115 = vmatpush2.msra.mxu0 %v50
  %116 = vmatprep.subr.mxu0 0.0
  %117 = vmatpush2.msra.mxu0 %v49
  %118 = vmatprep.subr.mxu0 0.0
  %119 = vmatpush2.msra.mxu0 %v48
  %120 = vmatprep.subr.mxu0 0.0
  %121 = vmatpush2.msra.mxu0 %v47
  %122 = vmatprep.subr.mxu0 0.0
  %123 = vmatpush2.msra.mxu0 %v46
  %124 = vmatprep.subr.mxu0 0.0
  %125 = vmatpush2.msra.mxu0 %v45
  %126 = vmatprep.subr.mxu0 0.0
  %127 = vmatpush2.msra.mxu0 %v44
  %128 = vmatprep.subr.mxu0 0.0
  %129 = vmatpush2.msra.mxu0 %v43
  %130 = vmatprep.subr.mxu0 0.0
  %131 = vmatpush2.msra.mxu0 %v42
  %132 = vmatprep.subr.mxu0 0.0
  %133 = vmatpush2.msra.mxu0 %v41
  %134 = vmatprep.subr.mxu0 0.0
  %135 = vmatpush2.msra.mxu0 %v40
  %136 = vmatprep.subr.mxu0 0.0
  %137 = vmatpush2.msra.mxu0 %v39
  %138 = vmatprep.mubr.f32.mxu0 %v15
  %139 = vmatmul.mubr.f32.gmra.mxu0 %v14
  %v140 = vpop.f32.mrf.mxu0
  %v141 = vadd.f32 %v63, %v140
  %v142 = vpop.f32.mrf.mxu0
  %143 = vmatprep.mubr.f32.mxu0 %v18
  %144 = vmatmul.mubr.f32.gmra.mxu0 %v17
  %v145 = vpop.f32.mrf.mxu0
  %v146 = vadd.f32 %v63, %v145
  %v147 = vpop.f32.mrf.mxu0
  %148 = vmatprep.mubr.f32.mxu0 %v21
  %149 = vmatmul.mubr.f32.gmra.mxu0 %v20
  %v150 = vpop.f32.mrf.mxu0
  %v151 = vadd.f32 %v63, %v150
  %v152 = vpop.f32.mrf.mxu0
  %153 = vdwg.mxu0
  %154 = vmatprep.subr.mxu0 0.0
  %155 = vmatpush1.msra.mxu0 0.0
  %156 = vmatprep.subr.mxu0 0.0
  %157 = vmatpush1.msra.mxu0 0.0
  %158 = vmatprep.subr.mxu0 0.0
  %159 = vmatpush1.msra.mxu0 0.0
  %160 = vmatprep.subr.mxu0 0.0
  %161 = vmatpush1.msra.mxu0 0.0
  %162 = vmatprep.subr.mxu0 0.0
  %163 = vmatpush1.msra.mxu0 0.0
  %164 = vmatprep.subr.mxu0 0.0
  %165 = vmatpush1.msra.mxu0 0.0
  %166 = vmatprep.subr.mxu0 0.0
  %167 = vmatpush1.msra.mxu0 0.0
  %168 = vmatprep.subr.mxu0 0.0
  %169 = vmatpush1.msra.mxu0 0.0
  %170 = vmatprep.subr.mxu0 0.0
  %171 = vmatpush1.msra.mxu0 0.0
  %172 = vmatprep.subr.mxu0 0.0
  %173 = vmatpush1.msra.mxu0 0.0
  %174 = vmatprep.subr.mxu0 0.0
  %175 = vmatpush1.msra.mxu0 0.0
  %176 = vmatprep.subr.mxu0 0.0
  %177 = vmatpush1.msra.mxu0 0.0
  %178 = vmatprep.subr.mxu0 0.0
  %179 = vmatpush1.msra.mxu0 %v58
  %180 = vmatprep.subr.mxu0 0.0
  %181 = vmatpush1.msra.mxu0 %v57
  %182 = vmatprep.subr.mxu0 0.0
  %183 = vmatpush1.msra.mxu0 %v56
  %184 = vmatprep.subr.mxu0 0.0
  %185 = vmatpush1.msra.mxu0 %v55
  %186 = vmatprep.subr.mxu0 0.0
  %187 = vmatpush2.msra.mxu0 0.0
  %188 = vmatprep.subr.mxu0 0.0
  %189 = vmatpush2.msra.mxu0 0.0
  %190 = vmatprep.subr.mxu0 0.0
  %191 = vmatpush2.msra.mxu0 0.0
  %192 = vmatprep.subr.mxu0 0.0
  %193 = vmatpush2.msra.mxu0 0.0
  %194 = vmatprep.subr.mxu0 0.0
  %195 = vmatpush2.msra.mxu0 0.0
  %196 = vmatprep.subr.mxu0 0.0
  %197 = vmatpush2.msra.mxu0 0.0
  %198 = vmatprep.subr.mxu0 0.0
  %199 = vmatpush2.msra.mxu0 0.0
  %200 = vmatprep.subr.mxu0 0.0
  %201 = vmatpush2.msra.mxu0 0.0
  %202 = vmatprep.subr.mxu0 0.0
  %203 = vmatpush2.msra.mxu0 0.0
  %204 = vmatprep.subr.mxu0 0.0
  %205 = vmatpush2.msra.mxu0 0.0
  %206 = vmatprep.subr.mxu0 0.0
  %207 = vmatpush2.msra.mxu0 0.0
  %208 = vmatprep.subr.mxu0 0.0
  %209 = vmatpush2.msra.mxu0 0.0
  %210 = vmatprep.subr.mxu0 0.0
  %211 = vmatpush2.msra.mxu0 0.0
  %212 = vmatprep.subr.mxu0 0.0
  %213 = vmatpush2.msra.mxu0 0.0
  %214 = vmatprep.subr.mxu0 0.0
  %215 = vmatpush2.msra.mxu0 0.0
  %216 = vmatprep.subr.mxu0 0.0
  %217 = vmatpush2.msra.mxu0 0.0
  %218 = vmatprep.mubr.f32.mxu0 0.0
  %219 = vmatmul.mubr.f32.gmra.mxu0 %v66
  %v220 = vpop.f32.mrf.mxu0
  %v221 = vadd.f32 %v141, %v220
  %v222 = vpop.f32.mrf.mxu0
  %223 = vmatprep.mubr.f32.mxu0 0.0
  %224 = vmatmul.mubr.f32.gmra.mxu0 %v69
  %v225 = vpop.f32.mrf.mxu0
  %v226 = vadd.f32 %v146, %v225
  %v227 = vpop.f32.mrf.mxu0
  %228 = vmatprep.mubr.f32.mxu0 0.0
  %229 = vmatmul.mubr.f32.gmra.mxu0 %v72
  %v230 = vpop.f32.mrf.mxu0
  %v231 = vadd.f32 %v151, %v230
  %v232 = vpop.f32.mrf.mxu0
  %233 = vdwg.mxu0
  %234 = vst [vmem:[%s3] sm:$0xff] %v221
  %235 = vst [vmem:[%s3 + $0x8] sm:$0xff] %v226
  %236 = vst [vmem:[%s3 + $0x10] sm:$0x3] %v231
  %v237 = vld [vmem:[%s1] sm:$0x3]
  %v238 = vld [vmem:[%s2 + $0x128] sm:$0xff]
  %v239 = vld [vmem:[%s2 + $0x130] sm:$0xff]
  %v240 = vld [vmem:[%s2 + $0x138] sm:$0xff]
  %v241 = vld [vmem:[%s2 + $0x140] sm:$0xff]
  %v242 = vld [vmem:[%s2 + $0x148] sm:$0x1]
  %v243 = vlaneseq
  %v244 = vshrl.u32 %v243, 7
  %v245 = vsub.s32 0, %v244
  %v246 = vrot.slane %v242, %v245
  %v248 = vsel %vm64, %v237, 0
  %250 = vmatprep.subr.mxu0 0.0
  %251 = vmatpush1.msra.mxu0 0.0
  %252 = vmatprep.subr.mxu0 0.0
  %253 = vmatpush1.msra.mxu0 0.0
  %254 = vmatprep.subr.mxu0 0.0
  %255 = vmatpush1.msra.mxu0 0.0
  %256 = vmatprep.subr.mxu0 0.0
  %257 = vmatpush1.msra.mxu0 0.0
  %258 = vmatprep.subr.mxu0 0.0
  %259 = vmatpush1.msra.mxu0 0.0
  %260 = vmatprep.subr.mxu0 0.0
  %261 = vmatpush1.msra.mxu0 0.0
  %262 = vmatprep.subr.mxu0 0.0
  %263 = vmatpush1.msra.mxu0 0.0
  %264 = vmatprep.subr.mxu0 0.0
  %265 = vmatpush1.msra.mxu0 0.0
  %266 = vmatprep.subr.mxu0 0.0
  %267 = vmatpush1.msra.mxu0 0.0
  %268 = vmatprep.subr.mxu0 0.0
  %269 = vmatpush1.msra.mxu0 0.0
  %270 = vmatprep.subr.mxu0 0.0
  %271 = vmatpush1.msra.mxu0 0.0
  %272 = vmatprep.subr.mxu0 0.0
  %273 = vmatpush1.msra.mxu0 0.0
  %274 = vmatprep.subr.mxu0 0.0
  %275 = vmatpush1.msra.mxu0 %v241
  %276 = vmatprep.subr.mxu0 0.0
  %277 = vmatpush1.msra.mxu0 %v240
  %278 = vmatprep.subr.mxu0 0.0
  %279 = vmatpush1.msra.mxu0 %v239
  %280 = vmatprep.subr.mxu0 0.0
  %281 = vmatpush1.msra.mxu0 %v238
  %282 = vmatprep.subr.mxu0 0.0
  %283 = vmatpush2.msra.mxu0 0.0
  %284 = vmatprep.subr.mxu0 0.0
  %285 = vmatpush2.msra.mxu0 0.0
  %286 = vmatprep.subr.mxu0 0.0
  %287 = vmatpush2.msra.mxu0 0.0
  %288 = vmatprep.subr.mxu0 0.0
  %289 = vmatpush2.msra.mxu0 0.0
  %290 = vmatprep.subr.mxu0 0.0
  %291 = vmatpush2.msra.mxu0 0.0
  %292 = vmatprep.subr.mxu0 0.0
  %293 = vmatpush2.msra.mxu0 0.0
  %294 = vmatprep.subr.mxu0 0.0
  %295 = vmatpush2.msra.mxu0 0.0
  %296 = vmatprep.subr.mxu0 0.0
  %297 = vmatpush2.msra.mxu0 0.0
  %298 = vmatprep.subr.mxu0 0.0
  %299 = vmatpush2.msra.mxu0 0.0
  %300 = vmatprep.subr.mxu0 0.0
  %301 = vmatpush2.msra.mxu0 0.0
  %302 = vmatprep.subr.mxu0 0.0
  %303 = vmatpush2.msra.mxu0 0.0
  %304 = vmatprep.subr.mxu0 0.0
  %305 = vmatpush2.msra.mxu0 0.0
  %306 = vmatprep.subr.mxu0 0.0
  %307 = vmatpush2.msra.mxu0 0.0
  %308 = vmatprep.subr.mxu0 0.0
  %309 = vmatpush2.msra.mxu0 0.0
  %310 = vmatprep.subr.mxu0 0.0
  %311 = vmatpush2.msra.mxu0 0.0
  %312 = vmatprep.subr.mxu0 0.0
  %313 = vmatpush2.msra.mxu0 0.0
  %314 = vmatprep.mubr.f32.mxu0 0.0
  %315 = vmatmul.mubr.f32.gmra.mxu0 %v248
  %v316 = vpop.f32.mrf.mxu0
  %v317 = vadd.f32 %v246, %v316
  %v318 = vpop.f32.mrf.mxu0
  %319 = vdwg.mxu0
  %320 = vst [vmem:[%s3 + $0x18] sm:$0x3] %v317
  // Predicated region
  $region14: #{kernel_predictor_forward.1} parent=0 // pred_check
    _
  $region15: #{kernel_predictor_forward.1} parent=0 // pred_check_branch
    %322 = sbr.rel (0) target = $region17
  $region16: #{kernel_predictor_forward.1} parent=0 // pred_region
    _
  $region17: #{kernel_predictor_forward.1} parent=0 // pred_fallthru
    _
  // Predicated region
  $region18: #{kernel_predictor_forward.1} parent=0 // pred_check
    _
  $region19: #{kernel_predictor_forward.1} parent=0 // pred_check_branch
    %324 = sbr.rel (0) target = $region21
  $region20: #{kernel_predictor_forward.1} parent=0 // pred_region
    _
  $region21: #{kernel_predictor_forward.1} parent=0 // pred_fallthru
    _

</llo_original>
